<compile_context>
chip_gen: v7x
topology: tpu7x:2x2x1
jax: 0.10.0
libtpu: 0.0.40
codegen_flags: <defaults>
</compile_context>

<pallas_src>
import jax
import jax.numpy as jnp
from jax import lax
from jax.experimental import pallas as pl
from jax.experimental.pallas import tpu as pltpu

EPS = 1e-12  # F.normalize default eps


def _num2vec_kernel(x_ref, w1_ref, b1_ref, p2_ref, p3_ref, o_ref):
    # x_ref:  [tm, 1]  f32
    # w1_ref: [1, 32]  f32     (fc1 has in_features == 1)
    # b1_ref: [1, 32]  f32
    # p2_ref: [33, 64] matmul dtype, rows = [w2 (32 rows); b2 (1 row, 8-aligned)]
    # p3_ref: [65, Fp] matmul dtype, rows = [w3 (64 rows); b3 (1 row, 8-aligned)]
    x = x_ref[...].astype(jnp.float32)                        # [tm, 1]
    w1 = w1_ref[...].astype(jnp.float32)                      # [1, 32]
    b1 = b1_ref[...].astype(jnp.float32)                      # [1, 32]

    # fc1 (in_features == 1) is an outer-product broadcast; no matmul needed.
    h1 = jnp.maximum(x * w1 + b1, 0.0)                        # [tm, 32] f32

    # fc2 + relu (MXU). Operands in matmul_dtype, accumulate in f32.
    p2 = p2_ref[...]                                          # [33, 64]
    w2 = p2[0:32, :]                                          # [32, 64]
    b2 = p2[32:33, :].astype(jnp.float32)                     # [1, 64]
    h2 = jnp.dot(h1.astype(w2.dtype), w2,
                 preferred_element_type=jnp.float32) + b2     # [tm, 64] f32
    h2 = jnp.maximum(h2, 0.0)

    # fc3 (MXU)
    p3 = p3_ref[...]                                          # [65, Fp]
    w3 = p3[0:64, :]                                          # [64, Fp]
    b3 = p3[64:65, :].astype(jnp.float32)                     # [1, Fp]
    wh = jnp.dot(h2.astype(w3.dtype), w3,
                 preferred_element_type=jnp.float32) + b3     # [tm, Fp] f32

    # F.normalize: wh / max(||wh||, eps) == wh * rsqrt(max(sum(wh^2), eps^2)).
    # rsqrt lands on the EUP slot; no full-width VALU divide.
    sumsq = jnp.sum(wh * wh, axis=-1, keepdims=True)          # [tm, 1]
    inv = lax.rsqrt(jnp.maximum(sumsq, EPS * EPS))
    o_ref[...] = jnp.maximum(wh * inv, 0.0).astype(o_ref.dtype)


def _round_up(n, m):
    return ((n + m - 1) // m) * m


def num2vec_forward(x, w1, b1, w2, b2, w3, b3, *, tm=512,
                    out_dtype=jnp.bfloat16, matmul_dtype=jnp.bfloat16):
    """Fused Num2Vec forward.

    x: [N, 1] float32 (one scalar per row, matching nn.Linear(1, 32)).
    Weights are stored transposed vs. PyTorch: w_k has shape [in, out].
    `tm` is the batch row tile (sweep per chip). `out_dtype`/`matmul_dtype`
    default to bf16 (writeback-bound kernel); pass jnp.float32 for both to get
    a bit-faithful f32 path.
    """
    N = x.shape[0]
    F = w3.shape[1]
    Fp = _round_up(F, 128)   # lane-dense output slab (unmasked vst)

    # fc1 params as separate, tiny [1, 32] operands (no unaligned row slice).
    w1_2d = w1.reshape(1, 32).astype(jnp.float32)
    b1_2d = b1.reshape(1, 32).astype(jnp.float32)

    # Zero-pad fc3 to Fp columns: padded columns produce exactly 0 in wh, so
    # the L2 norm (and all real columns) are unchanged.
    w3p = w3
    b3p = b3.reshape(1, -1)
    if Fp != F:
        w3p = jnp.pad(w3, ((0, 0), (0, Fp - F)))
        b3p = jnp.pad(b3p, ((0, 0), (0, Fp - F)))

    # Pack weights+bias; bias rows sit at 8-aligned starts (32, 64).
    p2 = jnp.concatenate([w2, b2.reshape(1, -1)], axis=0).astype(matmul_dtype)   # [33, 64]
    p3 = jnp.concatenate([w3p, b3p], axis=0).astype(matmul_dtype)                # [65, Fp]

    # Tile selection: big tiles amortize the ~0.35us/step overhead, but keep
    # >= 4 grid steps (>= 2 per v7x TensorCore so the software pipeline has
    # something to overlap) and keep tm a multiple of 8 (sublane).
    tm_eff = max(8, min(_round_up(tm, 8), _round_up(pl.cdiv(N, 4), 8)))
    grid = (pl.cdiv(N, tm_eff),)

    out_bytes = jnp.dtype(out_dtype).itemsize
    param_bytes = (w1_2d.size * 4 + b1_2d.size * 4
                   + p2.size * p2.dtype.itemsize + p3.size * p3.dtype.itemsize)
    cost = pl.CostEstimate(
        flops=N * (2 * 1 * 32 + 2 * 32 * 64 + 2 * 64 * Fp),
        transcendentals=N,                       # one rsqrt per row
        bytes_accessed=N * 4 + N * Fp * out_bytes + param_bytes,
    )

    full = lambda a: pl.BlockSpec(a.shape, lambda i: (0, 0))

    out = pl.pallas_call(
        _num2vec_kernel,
        out_shape=jax.ShapeDtypeStruct((N, Fp), out_dtype),
        grid_spec=pltpu.PrefetchScalarGridSpec(
            num_scalar_prefetch=0,
            grid=grid,
            in_specs=[
                pl.BlockSpec((tm_eff, 1), lambda i: (i, 0)),   # x row tile
                full(w1_2d), full(b1_2d), full(p2), full(p3),  # resident params
            ],
            out_specs=pl.BlockSpec((tm_eff, Fp), lambda i: (i, 0)),
        ),
        compiler_params=pltpu.CompilerParams(
            dimension_semantics=("parallel",),
            vmem_limit_bytes=16 << 20,   # realistic; fits v7x's 64 MiB with headroom
        ),
        cost_estimate=cost,
    )(x, w1_2d, b1_2d, p2, p3)

    if Fp != F:
        out = out[:, :F]
    return out


def _ref_forward(x, w1, b1, w2, b2, w3, b3):
    h = jnp.maximum(x @ w1 + b1, 0.0)
    h = jnp.maximum(h @ w2 + b2, 0.0)
    wh = h @ w3 + b3
    norm = jnp.sqrt(jnp.sum(wh * wh, axis=1, keepdims=True))
    return jnp.maximum(wh / jnp.maximum(norm, EPS), 0.0)


if __name__ == "__main__":
    key = jax.random.PRNGKey(0)
    k_x, k1, k2, k3, kb1, kb2, kb3 = jax.random.split(key, 7)

    N = 250            # not a multiple of the tile -> exercises masked partial block
    OUT_FEATURES = 128

    x = jax.random.normal(k_x, (N, 1), dtype=jnp.float32)

    # Deterministic synthetic parameters (stored as [in, out] so kernel does x @ W).
    w1 = 0.1 * jax.random.normal(k1, (1, 32), dtype=jnp.float32)
    b1 = 0.1 * jax.random.normal(kb1, (32,), dtype=jnp.float32)
    w2 = 0.1 * jax.random.normal(k2, (32, 64), dtype=jnp.float32)
    b2 = 0.1 * jax.random.normal(kb2, (64,), dtype=jnp.float32)
    w3 = 0.1 * jax.random.normal(k3, (64, OUT_FEATURES), dtype=jnp.float32)
    b3 = 0.1 * jax.random.normal(kb3, (OUT_FEATURES,), dtype=jnp.float32)

    ref = _ref_forward(x, w1, b1, w2, b2, w3, b3)

    # 1) Full-precision path: must match the reference to 1e-5.
    out_f32 = num2vec_forward(x, w1, b1, w2, b2, w3, b3,
                              out_dtype=jnp.float32, matmul_dtype=jnp.float32)
    out_f32 = jax.block_until_ready(out_f32)
    assert out_f32.shape == (N, OUT_FEATURES)
    assert jnp.max(jnp.abs(out_f32 - ref)) < 1e-5

    # 2) Default fast path: bf16 MXU operands + bf16 writeback (half the HBM bytes).
    out_bf16 = num2vec_forward(x, w1, b1, w2, b2, w3, b3)
    out_bf16 = jax.block_until_ready(out_bf16)
    assert out_bf16.dtype == jnp.bfloat16
    assert jnp.max(jnp.abs(out_bf16.astype(jnp.float32) - ref)) < 3e-2

    # 3) Non-multiple-of-128 feature dim: exercises the lane-pad + slice path.
    F2 = 96
    out_pad = num2vec_forward(x, w1, b1, w2, b2, w3[:, :F2], b3[:F2],
                              out_dtype=jnp.float32, matmul_dtype=jnp.float32)
    out_pad = jax.block_until_ready(out_pad)
    ref_pad = _ref_forward(x, w1, b1, w2, b2, w3[:, :F2], b3[:F2])
    assert out_pad.shape == (N, F2)
    assert jnp.max(jnp.abs(out_pad - ref_pad)) < 1e-5

    print("KERNEL_OK")
</pallas_src>

<mosaic_0001>
module attributes {stable_mosaic.version = 11 : i64} {
  func.func @_num2vec_kernel(%arg0: i32, %arg1: memref<64x1xf32, #tpu.memory_space<vmem>>, %arg2: memref<1x32xf32, #tpu.memory_space<vmem>>, %arg3: memref<1x32xf32, #tpu.memory_space<vmem>>, %arg4: memref<33x64xf32, #tpu.memory_space<vmem>>, %arg5: memref<65x128xf32, #tpu.memory_space<vmem>>, %arg6: memref<64x128xf32, #tpu.memory_space<vmem>>) attributes {dimension_semantics = [#tpu.dimension_semantics<parallel>], iteration_bounds = array<i64: 4>, scalar_prefetch = 0 : i64, scratch_operands = 0 : i64, tpu.core_type = #tpu.core_type<tc>, window_params = [{transform_indices = @transform_0, window_bounds = array<i64: 64, 1>}, {pipeline_mode = #tpu.pipeline_mode<synchronous>, transform_indices = @transform_1, window_bounds = array<i64: 1, 32>}, {pipeline_mode = #tpu.pipeline_mode<synchronous>, transform_indices = @transform_2, window_bounds = array<i64: 1, 32>}, {pipeline_mode = #tpu.pipeline_mode<synchronous>, transform_indices = @transform_3, window_bounds = array<i64: 33, 64>}, {pipeline_mode = #tpu.pipeline_mode<synchronous>, transform_indices = @transform_4, window_bounds = array<i64: 65, 128>}, {transform_indices = @transform_5, window_bounds = array<i64: 64, 128>}]} {
    %c0 = arith.constant 0 : index
    %c0_0 = arith.constant 0 : index
    %0 = vector.load %arg1[%c0, %c0_0] : memref<64x1xf32, #tpu.memory_space<vmem>>, vector<64x1xf32>
    %c0_1 = arith.constant 0 : index
    %c0_2 = arith.constant 0 : index
    %1 = vector.load %arg2[%c0_1, %c0_2] : memref<1x32xf32, #tpu.memory_space<vmem>>, vector<1x32xf32>
    %c0_3 = arith.constant 0 : index
    %c0_4 = arith.constant 0 : index
    %2 = vector.load %arg3[%c0_3, %c0_4] : memref<1x32xf32, #tpu.memory_space<vmem>>, vector<1x32xf32>
    %3 = vector.broadcast %0 : vector<64x1xf32> to vector<64x32xf32>
    %4 = vector.broadcast %1 : vector<1x32xf32> to vector<64x32xf32>
    %5 = arith.mulf %3, %4 : vector<64x32xf32>
    %6 = vector.broadcast %2 : vector<1x32xf32> to vector<64x32xf32>
    %7 = arith.addf %5, %6 : vector<64x32xf32>
    %cst = arith.constant 0.000000e+00 : f32
    %8 = vector.broadcast %cst : f32 to vector<64x32xf32>
    %9 = arith.maximumf %7, %8 : vector<64x32xf32>
    %c0_5 = arith.constant 0 : index
    %c0_6 = arith.constant 0 : index
    %10 = vector.load %arg4[%c0_5, %c0_6] : memref<33x64xf32, #tpu.memory_space<vmem>>, vector<33x64xf32>
    %11 = vector.extract_strided_slice %10 {offsets = [0, 0], sizes = [32, 64], strides = [1, 1]} : vector<33x64xf32> to vector<32x64xf32>
    %12 = vector.extract_strided_slice %10 {offsets = [32, 0], sizes = [1, 64], strides = [1, 1]} : vector<33x64xf32> to vector<1x64xf32>
    %cst_7 = arith.constant dense<0.000000e+00> : vector<64x64xf32>
    %13 = tpu.matmul %9, %11, %cst_7 {dimension_numbers = #tpu.dot_dimension_numbers<[1], [0], [0], [1], [0, 0, 1, 1], [], []>} : vector<64x32xf32>, vector<32x64xf32>, vector<64x64xf32> -> vector<64x64xf32>
    %14 = vector.broadcast %12 : vector<1x64xf32> to vector<64x64xf32>
    %15 = arith.addf %13, %14 : vector<64x64xf32>
    %cst_8 = arith.constant 0.000000e+00 : f32
    %16 = vector.broadcast %cst_8 : f32 to vector<64x64xf32>
    %17 = arith.maximumf %15, %16 : vector<64x64xf32>
    %c0_9 = arith.constant 0 : index
    %c0_10 = arith.constant 0 : index
    %18 = vector.load %arg5[%c0_9, %c0_10] : memref<65x128xf32, #tpu.memory_space<vmem>>, vector<65x128xf32>
    %19 = vector.extract_strided_slice %18 {offsets = [0, 0], sizes = [64, 128], strides = [1, 1]} : vector<65x128xf32> to vector<64x128xf32>
    %20 = vector.extract_strided_slice %18 {offsets = [64, 0], sizes = [1, 128], strides = [1, 1]} : vector<65x128xf32> to vector<1x128xf32>
    %cst_11 = arith.constant dense<0.000000e+00> : vector<64x128xf32>
    %21 = tpu.matmul %17, %19, %cst_11 {dimension_numbers = #tpu.dot_dimension_numbers<[1], [0], [0], [1], [0, 0, 1, 1], [], []>} : vector<64x64xf32>, vector<64x128xf32>, vector<64x128xf32> -> vector<64x128xf32>
    %22 = vector.broadcast %20 : vector<1x128xf32> to vector<64x128xf32>
    %23 = arith.addf %21, %22 : vector<64x128xf32>
    %24 = arith.mulf %23, %23 : vector<64x128xf32>
    %cst_12 = arith.constant dense<0.000000e+00> : vector<64xf32>
    %25 = vector.multi_reduction <add>, %24, %cst_12 [1] : vector<64x128xf32> to vector<64xf32>
    %26 = vector.shape_cast %25 : vector<64xf32> to vector<64x1xf32>
    %cst_13 = arith.constant 1.000000e-24 : f32
    %27 = vector.broadcast %cst_13 : f32 to vector<64x1xf32>
    %28 = arith.maximumf %26, %27 : vector<64x1xf32>
    %29 = math.rsqrt %28 : vector<64x1xf32>
    %30 = vector.broadcast %29 : vector<64x1xf32> to vector<64x128xf32>
    %31 = arith.mulf %23, %30 : vector<64x128xf32>
    %cst_14 = arith.constant 0.000000e+00 : f32
    %32 = vector.broadcast %cst_14 : f32 to vector<64x128xf32>
    %33 = arith.maximumf %31, %32 : vector<64x128xf32>
    %c0_15 = arith.constant 0 : index
    %c0_16 = arith.constant 0 : index
    %34 = vector.load %arg6[%c0_15, %c0_16] : memref<64x128xf32, #tpu.memory_space<vmem>>, vector<64x128xf32>
    tpu.vector_store %arg6[%c0_15, %c0_16], %33 {strides = array<i32>} : memref<64x128xf32, #tpu.memory_space<vmem>>, vector<64x128xf32>,
    return
  }
  func.func @transform_0(%arg0: i32) -> (i32, i32) {
    %c0_i32 = arith.constant 0 : i32
    %c0_i32_0 = arith.constant 0 : i32
    return %arg0, %c0_i32 : i32, i32
  }
  func.func @transform_1(%arg0: i32) -> (i32, i32) {
    %c0_i32 = arith.constant 0 : i32
    %c0_i32_0 = arith.constant 0 : i32
    %c0_i32_1 = arith.constant 0 : i32
    return %c0_i32, %c0_i32_0 : i32, i32
  }
  func.func @transform_2(%arg0: i32) -> (i32, i32) {
    %c0_i32 = arith.constant 0 : i32
    %c0_i32_0 = arith.constant 0 : i32
    %c0_i32_1 = arith.constant 0 : i32
    return %c0_i32, %c0_i32_0 : i32, i32
  }
  func.func @transform_3(%arg0: i32) -> (i32, i32) {
    %c0_i32 = arith.constant 0 : i32
    %c0_i32_0 = arith.constant 0 : i32
    %c0_i32_1 = arith.constant 0 : i32
    return %c0_i32, %c0_i32_0 : i32, i32
  }
  func.func @transform_4(%arg0: i32) -> (i32, i32) {
    %c0_i32 = arith.constant 0 : i32
    %c0_i32_0 = arith.constant 0 : i32
    %c0_i32_1 = arith.constant 0 : i32
    return %c0_i32, %c0_i32_0 : i32, i32
  }
  func.func @transform_5(%arg0: i32) -> (i32, i32) {
    %c0_i32 = arith.constant 0 : i32
    %c0_i32_0 = arith.constant 0 : i32
    return %arg0, %c0_i32 : i32, i32
  }
}

</mosaic_0001>

<llo_original>
// kernel: tpu_custom_call.1
$region0: #{tpu_custom_call.1}
  #allocation0 [shape = 'u32[]', space=smem, size = 0x4, offset = 0x4, fixed_abs, tag = 'smem constant byte address 0x4 - core index']
  #allocation1 [shape = 'u32[144,128]{1,0:T(1,128)}', space=vmem, size = 0x12000, scoped, tag = 'internal scratch']
  %s0 = inlined_call_operand.vmem [shape: f32[250,1], index: 0, kind: input, shape index: {}]
  %s1 = inlined_call_operand.vmem [shape: f32[1,32], index: 1, kind: input, shape index: {}]
  %s2 = inlined_call_operand.vmem [shape: f32[1,32], index: 2, kind: input, shape index: {}]
  %s3 = inlined_call_operand.vmem [shape: f32[33,64], index: 3, kind: input, shape index: {}]
  %s4 = inlined_call_operand.vmem [shape: f32[65,128], index: 4, kind: input, shape index: {}]
  %s5 = inlined_call_operand.hbm [shape: f32[250,128], index: 5, kind: output, shape index: {}]
  %s6 = sld [smem:[#allocation0]]
  $region53: #{tpu_custom_call.1} parent=0
    _
  %s8 = ssub.s32 1, %s6
  %s9 = scalar_select 0, %s8, %s6
  $region1: #{tpu_custom_call.1} parent=0
    #allocation2 [shape = 'u8[65536]{0}', space=vmem, size = 0x10000, scoped, tag = 'output window, operand 0']
    #allocation3 [shape = 's32[2]{0}', space=sflag, size = 0x8, scoped, tag = 'scoped memory for tpu_custom_call.1']
    %10 = vsyncpa [#allocation3], 0
    %s11 = scalar_lea.sflag [#allocation3], 1
    %12 = vsyncpa %s11, 0
    loop: start=0, step=1, limit=6
    $region2: #{tpu_custom_call.1} parent=1 // loop_pre_header
      _
    $region3: #{tpu_custom_call.1} parent=1 // loop_header
      %s14 = sphi 0, %s18
      %p15 = scmp.ge.s32.totalorder %s14, 6
      %s24 = sphi 0, %s26
      %s27 = sphi 0, %s24
      %s28 = sphi 0, %s27
      %s44 = sphi 0, %s28
      %s48 = sphi 0, %s48
      %s50 = sphi 0, %s48
      %s51 = sphi 0, %s50
      %s65 = sphi 0, %s51
      %s69 = sphi 0, %s69
      %s71 = sphi 0, %s69
      %s72 = sphi 0, %s71
      %s86 = sphi 0, %s72
      %s90 = sphi 0, %s90
      %s92 = sphi 0, %s90
      %s93 = sphi 0, %s92
      %s107 = sphi 0, %s93
      %s111 = sphi 0, %s111
      %s113 = sphi 0, %s111
      %s114 = sphi 0, %s113
      %s128 = sphi 0, %s114
      %s134 = sphi 0, %s136
      %s137 = sphi 0, %s134
      %s138 = sphi 0, %s137
      %s154 = sphi 0, %s138
    $region4: #{tpu_custom_call.1} parent=1 // loop_header_branch
      %17 = sbr.rel (%p15) target = $region8
    $region5: #{tpu_custom_call.1} parent=1 // loop_body
      %s19 = ssub.s32 %s14, 1
      %s20 = ssub.s32 %s14, 2
      %s21 = sadd.s32 %s14, 1
      %s22 = ssub.s32 %s14, %s21
      %p23 = scmp.eq.s32.totalorder %s22, 0
      %s25 = sadd.s32 %s24, 1
      %s26 = scalar_select %p23, %s24, %s25
      %p29 = pneg %p23
      %p30 = scmp.eq.s32.totalorder %s14, 3
      %p31 = por %p29, %p30
      %p32 = scmp.ne.s32.totalorder %s24, %s27
      %p33 = scmp.eq.s32.totalorder %s14, 0
      %p34 = por %p32, %p33
      %p35 = scmp.ne.s32.totalorder %s24, %s27
      %p36 = scmp.eq.s32.totalorder %s19, 3
      %p37 = por %p35, %p36
      %p38 = scmp.ne.s32.totalorder %s27, %s28
      %p39 = scmp.eq.s32.totalorder %s19, 0
      %p40 = por %p38, %p39
      %p41 = scmp.ne.s32.totalorder %s27, %s28
      %p42 = scmp.eq.s32.totalorder %s20, 3
      %p43 = por %p41, %p42
      %p45 = scmp.ne.s32.totalorder %s28, %s44
      %p46 = scmp.eq.s32.totalorder %s20, 0
      %p47 = por %p45, %p46
      %s49 = sadd.s32 %s48, 1
      %p52 = scmp.eq.s32.totalorder %s14, 3
      %p53 = scmp.ne.s32.totalorder %s48, %s50
      %p54 = scmp.eq.s32.totalorder %s14, 0
      %p55 = por %p53, %p54
      %p56 = scmp.ne.s32.totalorder %s48, %s50
      %p57 = scmp.eq.s32.totalorder %s19, 3
      %p58 = por %p56, %p57
      %p59 = scmp.ne.s32.totalorder %s50, %s51
      %p60 = scmp.eq.s32.totalorder %s19, 0
      %p61 = por %p59, %p60
      %p62 = scmp.ne.s32.totalorder %s50, %s51
      %p63 = scmp.eq.s32.totalorder %s20, 3
      %p64 = por %p62, %p63
      %p66 = scmp.ne.s32.totalorder %s51, %s65
      %p67 = scmp.eq.s32.totalorder %s20, 0
      %p68 = por %p66, %p67
      %s70 = sadd.s32 %s69, 1
      %p73 = scmp.eq.s32.totalorder %s14, 3
      %p74 = scmp.ne.s32.totalorder %s69, %s71
      %p75 = scmp.eq.s32.totalorder %s14, 0
      %p76 = por %p74, %p75
      %p77 = scmp.ne.s32.totalorder %s69, %s71
      %p78 = scmp.eq.s32.totalorder %s19, 3
      %p79 = por %p77, %p78
      %p80 = scmp.ne.s32.totalorder %s71, %s72
      %p81 = scmp.eq.s32.totalorder %s19, 0
      %p82 = por %p80, %p81
      %p83 = scmp.ne.s32.totalorder %s71, %s72
      %p84 = scmp.eq.s32.totalorder %s20, 3
      %p85 = por %p83, %p84
      %p87 = scmp.ne.s32.totalorder %s72, %s86
      %p88 = scmp.eq.s32.totalorder %s20, 0
      %p89 = por %p87, %p88
      %s91 = sadd.s32 %s90, 1
      %p94 = scmp.eq.s32.totalorder %s14, 3
      %p95 = scmp.ne.s32.totalorder %s90, %s92
      %p96 = scmp.eq.s32.totalorder %s14, 0
      %p97 = por %p95, %p96
      %p98 = scmp.ne.s32.totalorder %s90, %s92
      %p99 = scmp.eq.s32.totalorder %s19, 3
      %p100 = por %p98, %p99
      %p101 = scmp.ne.s32.totalorder %s92, %s93
      %p102 = scmp.eq.s32.totalorder %s19, 0
      %p103 = por %p101, %p102
      %p104 = scmp.ne.s32.totalorder %s92, %s93
      %p105 = scmp.eq.s32.totalorder %s20, 3
      %p106 = por %p104, %p105
      %p108 = scmp.ne.s32.totalorder %s93, %s107
      %p109 = scmp.eq.s32.totalorder %s20, 0
      %p110 = por %p108, %p109
      %s112 = sadd.s32 %s111, 1
      %p115 = scmp.eq.s32.totalorder %s14, 3
      %p116 = scmp.ne.s32.totalorder %s111, %s113
      %p117 = scmp.eq.s32.totalorder %s14, 0
      %p118 = por %p116, %p117
      %p119 = scmp.ne.s32.totalorder %s111, %s113
      %p120 = scmp.eq.s32.totalorder %s19, 3
      %p121 = por %p119, %p120
      %p122 = scmp.ne.s32.totalorder %s113, %s114
      %p123 = scmp.eq.s32.totalorder %s19, 0
      %p124 = por %p122, %p123
      %p125 = scmp.ne.s32.totalorder %s113, %s114
      %p126 = scmp.eq.s32.totalorder %s20, 3
      %p127 = por %p125, %p126
      %p129 = scmp.ne.s32.totalorder %s114, %s128
      %p130 = scmp.eq.s32.totalorder %s20, 0
      %p131 = por %p129, %p130
      %s132 = ssub.s32 %s14, %s21
      %p133 = scmp.eq.s32.totalorder %s132, 0
      %s135 = sadd.s32 %s134, 1
      %s136 = scalar_select %p133, %s134, %s135
      %p139 = pneg %p133
      %p140 = scmp.eq.s32.totalorder %s14, 3
      %p141 = por %p139, %p140
      %p142 = scmp.ne.s32.totalorder %s134, %s137
      %p143 = scmp.eq.s32.totalorder %s14, 0
      %p144 = por %p142, %p143
      %p145 = scmp.ne.s32.totalorder %s134, %s137
      %p146 = scmp.eq.s32.totalorder %s19, 3
      %p147 = por %p145, %p146
      %p148 = scmp.ne.s32.totalorder %s137, %s138
      %p149 = scmp.eq.s32.totalorder %s19, 0
      %p150 = por %p148, %p149
      %p151 = scmp.ne.s32.totalorder %s137, %s138
      %p152 = scmp.eq.s32.totalorder %s20, 3
      %p153 = por %p151, %p152
      %p155 = scmp.ne.s32.totalorder %s138, %s154
      %p156 = scmp.eq.s32.totalorder %s20, 0
      %p157 = por %p155, %p156
      %p158 = scmp.le.s32.totalorder 1, %s14
      %p159 = scmp.lt.s32.totalorder %s14, 5
      %p160 = pnand %p158, %p159
      %p161 = pneg %p160
      // Predicated region
      $region9: #{tpu_custom_call.1} parent=5 // pred_check
        _
      $region10: #{tpu_custom_call.1} parent=5 // pred_check_branch
        %163 = sbr.rel (%p160) target = $region12
      $region11: #{tpu_custom_call.1} parent=5 // pred_region
        %s164 = ssub.s32 %s14, 1
        // Predicated region
        $region13: #{tpu_custom_call.1} parent=11 // pred_check
          %p165 = pneg %p61
        $region14: #{tpu_custom_call.1} parent=11 // pred_check_branch
          %167 = sbr.rel (%p165) target = $region16
        $region15: #{tpu_custom_call.1} parent=11 // pred_region
          _
        $region16: #{tpu_custom_call.1} parent=11 // pred_fallthru
          _
        // Predicated region
        $region17: #{tpu_custom_call.1} parent=11 // pred_check
          %p168 = pneg %p82
        $region18: #{tpu_custom_call.1} parent=11 // pred_check_branch
          %170 = sbr.rel (%p168) target = $region20
        $region19: #{tpu_custom_call.1} parent=11 // pred_region
          _
        $region20: #{tpu_custom_call.1} parent=11 // pred_fallthru
          _
        // Predicated region
        $region21: #{tpu_custom_call.1} parent=11 // pred_check
          %p171 = pneg %p103
        $region22: #{tpu_custom_call.1} parent=11 // pred_check_branch
          %173 = sbr.rel (%p171) target = $region24
        $region23: #{tpu_custom_call.1} parent=11 // pred_region
          _
        $region24: #{tpu_custom_call.1} parent=11 // pred_fallthru
          _
        // Predicated region
        $region25: #{tpu_custom_call.1} parent=11 // pred_check
          %p174 = pneg %p124
        $region26: #{tpu_custom_call.1} parent=11 // pred_check_branch
          %176 = sbr.rel (%p174) target = $region28
        $region27: #{tpu_custom_call.1} parent=11 // pred_region
          _
        $region28: #{tpu_custom_call.1} parent=11 // pred_fallthru
          _
      $region12: #{tpu_custom_call.1} parent=5 // pred_fallthru
        _
      %p177 = scmp.lt.s32.totalorder %s14, 4
      // Predicated region
      $region29: #{tpu_custom_call.1} parent=5 // pred_check
        %p178 = pneg %p177
      $region30: #{tpu_custom_call.1} parent=5 // pred_check_branch
        %180 = sbr.rel (%p178) target = $region32
      $region31: #{tpu_custom_call.1} parent=5 // pred_region
        // Predicated region
        $region33: #{tpu_custom_call.1} parent=31 // pred_check
          %p181 = pneg %p34
        $region34: #{tpu_custom_call.1} parent=31 // pred_check_branch
          %183 = sbr.rel (%p181) target = $region36
        $region35: #{tpu_custom_call.1} parent=31 // pred_region
          %s184 = smul.u32 8, %s14
          %p185 = scmp.lt.s32.totalorder %s184, 31
          %s186 = scalar_select %p185, %s184, 31
          %s187 = smul.addr %s186, 8
          %s188 = scalar_lea.vmem %s0, %s187
          %s189 = smul.u32 8, %s14
        $region36: #{tpu_custom_call.1} parent=31 // pred_fallthru
          _
      $region32: #{tpu_custom_call.1} parent=5 // pred_fallthru
        _
      %p190 = scmp.le.s32.totalorder 1, %s14
      %p191 = scmp.lt.s32.totalorder %s14, 5
      %p192 = pnand %p190, %p191
      %p193 = pneg %p192
      // Predicated region
      $region37: #{tpu_custom_call.1} parent=5 // pred_check
        _
      $region38: #{tpu_custom_call.1} parent=5 // pred_check_branch
        %195 = sbr.rel (%p192) target = $region40
      $region39: #{tpu_custom_call.1} parent=5 // pred_region
        %s196 = ssub.s32 %s14, 1
        %s197 = smul.u32 8, %s19
        %p198 = scmp.lt.s32.totalorder %s197, 31
        %s199 = scalar_select %p198, %s197, 31
        %s200 = smul.addr %s199, 8
        %s201 = scalar_lea.vmem %s0, %s200
        %p202 = pneg %p40
        %p203 = pneg %p37
        %p204 = pneg %p61
        %p205 = pneg %p58
        %p206 = pneg %p82
        %p207 = pneg %p79
        %p208 = pneg %p103
        %p209 = pneg %p100
        %p210 = pneg %p124
        %p211 = pneg %p121
        %p212 = pneg %p150
        %p213 = pneg %p147
        %s214 = sand.u32 %s137, 1
        %s215 = scalar_lea.sflag [#allocation3], %s214
        %s216 = sand.u32 %s137, 1
        %s217 = smul.addr %s216, 64
        %s218 = scalar_lea.vmem [#allocation2], %s217
        %s219 = smul.u32 8, %s19
        %p220 = scmp.lt.s32.totalorder %s219, 31
        %s221 = scalar_select %p220, %s219, 31
        %s222 = smul.addr %s221, 8
        %s223 = scalar_lea.vmem %s0, %s222
        %s224 = smul.u32 8, %s19
        %s225 = smul.u32 8, %s19
        %v226 = vld [vmem:[%s223] sm:$0xff]
        %v227 = vld [vmem:[%s223 + $0x8] sm:$0xff]
        %v228 = vld [vmem:[%s223 + $0x10] sm:$0xff]
        %v229 = vld [vmem:[%s223 + $0x18] sm:$0xff]
        %v230 = vld [vmem:[%s223 + $0x20] sm:$0xff]
        %v231 = vld [vmem:[%s223 + $0x28] sm:$0xff]
        %v232 = vld [vmem:[%s223 + $0x30] sm:$0xff]
        %v233 = vld [vmem:[%s223 + $0x38] sm:$0xff]
        %v234 = vld [vmem:[%s1] sm:$0x1]
        %v235 = vld [vmem:[%s2] sm:$0x1]
        %237 = vset.pattern.permute.xlu0 0
        %238 = vperm.xlu0 %237, %v226
        %v239 = vpop.permute.xlu0 %238
        %242 = vset.pattern.permute.xlu0 0
        %243 = vperm.xlu0 %242, %v227
        %v244 = vpop.permute.xlu0 %243
        %247 = vset.pattern.permute.xlu0 0
        %248 = vperm.xlu0 %247, %v228
        %v249 = vpop.permute.xlu0 %248
        %252 = vset.pattern.permute.xlu0 0
        %253 = vperm.xlu0 %252, %v229
        %v254 = vpop.permute.xlu0 %253
        %257 = vset.pattern.permute.xlu0 0
        %258 = vperm.xlu0 %257, %v230
        %v259 = vpop.permute.xlu0 %258
        %262 = vset.pattern.permute.xlu0 0
        %263 = vperm.xlu0 %262, %v231
        %v264 = vpop.permute.xlu0 %263
        %267 = vset.pattern.permute.xlu0 0
        %268 = vperm.xlu0 %267, %v232
        %v269 = vpop.permute.xlu0 %268
        %272 = vset.pattern.permute.xlu0 0
        %273 = vperm.xlu0 %272, %v233
        %v274 = vpop.permute.xlu0 %273
        %v277 = vlaneseq
        %v278 = vshrl.u32 %v277, 7
        %v279 = vsub.s32 0, %v278
        %v280 = vrot.slane %v234, %v279
        %v282 = vmul.f32 %v239, %v280
        %v283 = vmul.f32 %v244, %v280
        %v284 = vmul.f32 %v249, %v280
        %v285 = vmul.f32 %v254, %v280
        %v286 = vmul.f32 %v259, %v280
        %v287 = vmul.f32 %v264, %v280
        %v288 = vmul.f32 %v269, %v280
        %v289 = vmul.f32 %v274, %v280
        %v291 = vlaneseq
        %v292 = vshrl.u32 %v291, 7
        %v293 = vsub.s32 0, %v292
        %v294 = vrot.slane %v235, %v293
        %v296 = vadd.f32 %v282, %v294
        %v297 = vadd.f32 %v283, %v294
        %v298 = vadd.f32 %v284, %v294
        %v299 = vadd.f32 %v285, %v294
        %v300 = vadd.f32 %v286, %v294
        %v301 = vadd.f32 %v287, %v294
        %v302 = vadd.f32 %v288, %v294
        %v303 = vadd.f32 %v289, %v294
        %v304 = vmax.f32 %v296, 0.0
        %v305 = vmax.f32 %v297, 0.0
        %v306 = vmax.f32 %v298, 0.0
        %v307 = vmax.f32 %v299, 0.0
        %v308 = vmax.f32 %v300, 0.0
        %v309 = vmax.f32 %v301, 0.0
        %v310 = vmax.f32 %v302, 0.0
        %v311 = vmax.f32 %v303, 0.0
        %v312 = vld [vmem:[%s3] sm:$0xff]
        %v313 = vld [vmem:[%s3 + $0x8] sm:$0xff]
        %v314 = vld [vmem:[%s3 + $0x10] sm:$0xff]
        %v315 = vld [vmem:[%s3 + $0x18] sm:$0xff]
        %v316 = vld [vmem:[%s3 + $0x20] sm:$0x1]
        %v317 = vlaneseq
        %v318 = vshrl.u32 %v317, 7
        %v319 = vsub.s32 0, %v318
        %v320 = vrot.slane %v316, %v319
        %vm321 = vcmask 261120
        %v323 = vsel %vm321, %v304, 0
        %v326 = vsel %vm321, %v305, 0
        %v329 = vsel %vm321, %v306, 0
        %v332 = vsel %vm321, %v307, 0
        %v335 = vsel %vm321, %v308, 0
        %v338 = vsel %vm321, %v309, 0
        %v341 = vsel %vm321, %v310, 0
        %v344 = vsel %vm321, %v311, 0
        %346 = vmatprep.subr.mxu0 0.0
        %347 = vmatpush1.msra.mxu0 %v312
        %348 = vmatprep.subr.mxu0 0.0
        %349 = vmatpush1.msra.mxu0 %v313
        %350 = vmatprep.subr.mxu0 0.0
        %351 = vmatpush1.msra.mxu0 %v314
        %352 = vmatprep.subr.mxu0 0.0
        %353 = vmatpush1.msra.mxu0 %v315
        %354 = vmatprep.subr.mxu0 0.0
        %355 = vmatpush1.msra.mxu0 0.0
        %356 = vmatprep.subr.mxu0 0.0
        %357 = vmatpush1.msra.mxu0 0.0
        %358 = vmatprep.subr.mxu0 0.0
        %359 = vmatpush1.msra.mxu0 0.0
        %360 = vmatprep.subr.mxu0 0.0
        %361 = vmatpush1.msra.mxu0 0.0
        %362 = vmatprep.subr.mxu0 0.0
        %363 = vmatpush1.msra.mxu0 0.0
        %364 = vmatprep.subr.mxu0 0.0
        %365 = vmatpush1.msra.mxu0 0.0
        %366 = vmatprep.subr.mxu0 0.0
        %367 = vmatpush1.msra.mxu0 0.0
        %368 = vmatprep.subr.mxu0 0.0
        %369 = vmatpush1.msra.mxu0 0.0
        %370 = vmatprep.subr.mxu0 0.0
        %371 = vmatpush1.msra.mxu0 0.0
        %372 = vmatprep.subr.mxu0 0.0
        %373 = vmatpush1.msra.mxu0 0.0
        %374 = vmatprep.subr.mxu0 0.0
        %375 = vmatpush1.msra.mxu0 0.0
        %376 = vmatprep.subr.mxu0 0.0
        %377 = vmatpush1.msra.mxu0 0.0
        %378 = vmatprep.subr.mxu0 0.0
        %379 = vmatpush1.msra.mxu0 0.0
        %380 = vmatprep.subr.mxu0 0.0
        %381 = vmatpush1.msra.mxu0 0.0
        %382 = vmatprep.subr.mxu0 0.0
        %383 = vmatpush1.msra.mxu0 0.0
        %384 = vmatprep.subr.mxu0 0.0
        %385 = vmatpush1.msra.mxu0 0.0
        %386 = vmatprep.subr.mxu0 0.0
        %387 = vmatpush1.msra.mxu0 0.0
        %388 = vmatprep.subr.mxu0 0.0
        %389 = vmatpush1.msra.mxu0 0.0
        %390 = vmatprep.subr.mxu0 0.0
        %391 = vmatpush1.msra.mxu0 0.0
        %392 = vmatprep.subr.mxu0 0.0
        %393 = vmatpush1.msra.mxu0 0.0
        %394 = vmatprep.subr.mxu0 0.0
        %395 = vmatpush1.msra.mxu0 0.0
        %396 = vmatprep.subr.mxu0 0.0
        %397 = vmatpush1.msra.mxu0 0.0
        %398 = vmatprep.subr.mxu0 0.0
        %399 = vmatpush1.msra.mxu0 0.0
        %400 = vmatprep.subr.mxu0 0.0
        %401 = vmatpush1.msra.mxu0 0.0
        %402 = vmatprep.subr.mxu0 0.0
        %403 = vmatpush1.msra.mxu0 0.0
        %404 = vmatprep.subr.mxu0 0.0
        %405 = vmatpush1.msra.mxu0 0.0
        %406 = vmatprep.subr.mxu0 0.0
        %407 = vmatpush1.msra.mxu0 0.0
        %408 = vmatprep.subr.mxu0 0.0
        %409 = vmatpush1.msra.mxu0 0.0
        %410 = vmatprep.mubr.f32.mxu0 0.0
        %411 = vmatmul.mubr.f32.gmra.mrb[0].mxu0 %v323
        %v412 = vpop.f32.mrb[0].mxu0
        %v413 = vadd.f32 %v320, %v412
        %v414 = vpop.f32.mrb[0].mxu0
        %415 = vmatprep.mubr.f32.mxu0 0.0
        %416 = vmatmul.mubr.f32.gmra.mrb[0].mxu0 %v326
        %v417 = vpop.f32.mrb[0].mxu0
        %v418 = vadd.f32 %v320, %v417
        %v419 = vpop.f32.mrb[0].mxu0
        %420 = vmatprep.mubr.f32.mxu0 0.0
        %421 = vmatmul.mubr.f32.gmra.mrb[0].mxu0 %v329
        %v422 = vpop.f32.mrb[0].mxu0
        %v423 = vadd.f32 %v320, %v422
        %v424 = vpop.f32.mrb[0].mxu0
        %425 = vmatprep.mubr.f32.mxu0 0.0
        %426 = vmatmul.mubr.f32.gmra.mrb[0].mxu0 %v332
        %v427 = vpop.f32.mrb[0].mxu0
        %v428 = vadd.f32 %v320, %v427
        %v429 = vpop.f32.mrb[0].mxu0
        %430 = vmatprep.mubr.f32.mxu0 0.0
        %431 = vmatmul.mubr.f32.gmra.mrb[0].mxu0 %v335
        %v432 = vpop.f32.mrb[0].mxu0
        %v433 = vadd.f32 %v320, %v432
        %v434 = vpop.f32.mrb[0].mxu0
        %435 = vmatprep.mubr.f32.mxu0 0.0
        %436 = vmatmul.mubr.f32.gmra.mrb[0].mxu0 %v338
        %v437 = vpop.f32.mrb[0].mxu0
        %v438 = vadd.f32 %v320, %v437
        %v439 = vpop.f32.mrb[0].mxu0
        %440 = vmatprep.mubr.f32.mxu0 0.0
        %441 = vmatmul.mubr.f32.gmra.mrb[0].mxu0 %v341
        %v442 = vpop.f32.mrb[0].mxu0
        %v443 = vadd.f32 %v320, %v442
        %v444 = vpop.f32.mrb[0].mxu0
        %445 = vmatprep.mubr.f32.mxu0 0.0
        %446 = vmatmul.mubr.f32.gmra.mrb[0].mxu0 %v344
        %v447 = vpop.f32.mrb[0].mxu0
        %v448 = vadd.f32 %v320, %v447
        %v449 = vpop.f32.mrb[0].mxu0
        %450 = vdwg.mxu0
        %v451 = vmax.f32 %v413, 0.0
        %v452 = vmax.f32 %v418, 0.0
        %v453 = vmax.f32 %v423, 0.0
        %v454 = vmax.f32 %v428, 0.0
        %v455 = vmax.f32 %v433, 0.0
        %v456 = vmax.f32 %v438, 0.0
        %v457 = vmax.f32 %v443, 0.0
        %v458 = vmax.f32 %v448, 0.0
        %v459 = vld [vmem:[%s4] sm:$0xff]
        %v460 = vld [vmem:[%s4 + $0x8] sm:$0xff]
        %v461 = vld [vmem:[%s4 + $0x10] sm:$0xff]
        %v462 = vld [vmem:[%s4 + $0x18] sm:$0xff]
        %v463 = vld [vmem:[%s4 + $0x20] sm:$0xff]
        %v464 = vld [vmem:[%s4 + $0x28] sm:$0xff]
        %v465 = vld [vmem:[%s4 + $0x30] sm:$0xff]
        %v466 = vld [vmem:[%s4 + $0x38] sm:$0xff]
        %v467 = vld [vmem:[%s4 + $0x40] sm:$0x1]
        %v468 = vlaneseq
        %v469 = vshrl.u32 %v468, 7
        %v470 = vsub.s32 0, %v469
        %v471 = vrot.slane %v467, %v470
        %vm472 = vcmask 523264
        %v474 = vsel %vm472, %v451, 0
        %v477 = vsel %vm472, %v452, 0
        %v480 = vsel %vm472, %v453, 0
        %v483 = vsel %vm472, %v454, 0
        %v486 = vsel %vm472, %v455, 0
        %v489 = vsel %vm472, %v456, 0
        %v492 = vsel %vm472, %v457, 0
        %v495 = vsel %vm472, %v458, 0
        %497 = vmatprep.subr.mxu0 0.0
        %498 = vmatpush1.msra.mxu0 %v459
        %499 = vmatprep.subr.mxu0 0.0
        %500 = vmatpush1.msra.mxu0 %v460
        %501 = vmatprep.subr.mxu0 0.0
        %502 = vmatpush1.msra.mxu0 %v461
        %503 = vmatprep.subr.mxu0 0.0
        %504 = vmatpush1.msra.mxu0 %v462
        %505 = vmatprep.subr.mxu0 0.0
        %506 = vmatpush1.msra.mxu0 %v463
        %507 = vmatprep.subr.mxu0 0.0
        %508 = vmatpush1.msra.mxu0 %v464
        %509 = vmatprep.subr.mxu0 0.0
        %510 = vmatpush1.msra.mxu0 %v465
        %511 = vmatprep.subr.mxu0 0.0
        %512 = vmatpush1.msra.mxu0 %v466
        %513 = vmatprep.subr.mxu0 0.0
        %514 = vmatpush1.msra.mxu0 0.0
        %515 = vmatprep.subr.mxu0 0.0
        %516 = vmatpush1.msra.mxu0 0.0
        %517 = vmatprep.subr.mxu0 0.0
        %518 = vmatpush1.msra.mxu0 0.0
        %519 = vmatprep.subr.mxu0 0.0
        %520 = vmatpush1.msra.mxu0 0.0
        %521 = vmatprep.subr.mxu0 0.0
        %522 = vmatpush1.msra.mxu0 0.0
        %523 = vmatprep.subr.mxu0 0.0
        %524 = vmatpush1.msra.mxu0 0.0
        %525 = vmatprep.subr.mxu0 0.0
        %526 = vmatpush1.msra.mxu0 0.0
        %527 = vmatprep.subr.mxu0 0.0
        %528 = vmatpush1.msra.mxu0 0.0
        %529 = vmatprep.subr.mxu0 0.0
        %530 = vmatpush1.msra.mxu0 0.0
        %531 = vmatprep.subr.mxu0 0.0
        %532 = vmatpush1.msra.mxu0 0.0
        %533 = vmatprep.subr.mxu0 0.0
        %534 = vmatpush1.msra.mxu0 0.0
        %535 = vmatprep.subr.mxu0 0.0
        %536 = vmatpush1.msra.mxu0 0.0
        %537 = vmatprep.subr.mxu0 0.0
        %538 = vmatpush1.msra.mxu0 0.0
        %539 = vmatprep.subr.mxu0 0.0
        %540 = vmatpush1.msra.mxu0 0.0
        %541 = vmatprep.subr.mxu0 0.0
        %542 = vmatpush1.msra.mxu0 0.0
        %543 = vmatprep.subr.mxu0 0.0
        %544 = vmatpush1.msra.mxu0 0.0
        %545 = vmatprep.subr.mxu0 0.0
        %546 = vmatpush1.msra.mxu0 0.0
        %547 = vmatprep.subr.mxu0 0.0
        %548 = vmatpush1.msra.mxu0 0.0
        %549 = vmatprep.subr.mxu0 0.0
        %550 = vmatpush1.msra.mxu0 0.0
        %551 = vmatprep.subr.mxu0 0.0
        %552 = vmatpush1.msra.mxu0 0.0
        %553 = vmatprep.subr.mxu0 0.0
        %554 = vmatpush1.msra.mxu0 0.0
        %555 = vmatprep.subr.mxu0 0.0
        %556 = vmatpush1.msra.mxu0 0.0
        %557 = vmatprep.subr.mxu0 0.0
        %558 = vmatpush1.msra.mxu0 0.0
        %559 = vmatprep.subr.mxu0 0.0
        %560 = vmatpush1.msra.mxu0 0.0
        %561 = vmatprep.mubr.f32.mxu0 0.0
        %562 = vmatmul.mubr.f32.gmra.mrb[0].mxu0 %v474
        %v563 = vpop.f32.mrb[0].mxu0
        %v564 = vadd.f32 %v471, %v563
        %v565 = vpop.f32.mrb[0].mxu0
        %566 = vmatprep.mubr.f32.mxu0 0.0
        %567 = vmatmul.mubr.f32.gmra.mrb[0].mxu0 %v477
        %v568 = vpop.f32.mrb[0].mxu0
        %v569 = vadd.f32 %v471, %v568
        %v570 = vpop.f32.mrb[0].mxu0
        %571 = vmatprep.mubr.f32.mxu0 0.0
        %572 = vmatmul.mubr.f32.gmra.mrb[0].mxu0 %v480
        %v573 = vpop.f32.mrb[0].mxu0
        %v574 = vadd.f32 %v471, %v573
        %v575 = vpop.f32.mrb[0].mxu0
        %576 = vmatprep.mubr.f32.mxu0 0.0
        %577 = vmatmul.mubr.f32.gmra.mrb[0].mxu0 %v483
        %v578 = vpop.f32.mrb[0].mxu0
        %v579 = vadd.f32 %v471, %v578
        %v580 = vpop.f32.mrb[0].mxu0
        %581 = vmatprep.mubr.f32.mxu0 0.0
        %582 = vmatmul.mubr.f32.gmra.mrb[0].mxu0 %v486
        %v583 = vpop.f32.mrb[0].mxu0
        %v584 = vadd.f32 %v471, %v583
        %v585 = vpop.f32.mrb[0].mxu0
        %586 = vmatprep.mubr.f32.mxu0 0.0
        %587 = vmatmul.mubr.f32.gmra.mrb[0].mxu0 %v489
        %v588 = vpop.f32.mrb[0].mxu0
        %v589 = vadd.f32 %v471, %v588
        %v590 = vpop.f32.mrb[0].mxu0
        %591 = vmatprep.mubr.f32.mxu0 0.0
        %592 = vmatmul.mubr.f32.gmra.mrb[0].mxu0 %v492
        %v593 = vpop.f32.mrb[0].mxu0
        %v594 = vadd.f32 %v471, %v593
        %v595 = vpop.f32.mrb[0].mxu0
        %596 = vmatprep.mubr.f32.mxu0 0.0
        %597 = vmatmul.mubr.f32.gmra.mrb[0].mxu0 %v495
        %v598 = vpop.f32.mrb[0].mxu0
        %v599 = vadd.f32 %v471, %v598
        %v600 = vpop.f32.mrb[0].mxu0
        %601 = vdwg.mxu0
        %v602 = vmul.f32 %v564, %v564
        %v603 = vmul.f32 %v569, %v569
        %v604 = vmul.f32 %v574, %v574
        %v605 = vmul.f32 %v579, %v579
        %v606 = vmul.f32 %v584, %v584
        %v607 = vmul.f32 %v589, %v589
        %v608 = vmul.f32 %v594, %v594
        %v609 = vmul.f32 %v599, %v599
        %610 = vadd.xlane.f32.xlu0 %v602
        %v611 = vpop.xlane.xlu0 %610
        %612 = vadd.xlane.f32.xlu0 %v603
        %v613 = vpop.xlane.xlu0 %612
        %614 = vadd.xlane.f32.xlu0 %v604
        %v615 = vpop.xlane.xlu0 %614
        %616 = vadd.xlane.f32.xlu0 %v605
        %v617 = vpop.xlane.xlu0 %616
        %618 = vadd.xlane.f32.xlu0 %v606
        %v619 = vpop.xlane.xlu0 %618
        %620 = vadd.xlane.f32.xlu0 %v607
        %v621 = vpop.xlane.xlu0 %620
        %622 = vadd.xlane.f32.xlu0 %v608
        %v623 = vpop.xlane.xlu0 %622
        %624 = vadd.xlane.f32.xlu0 %v609
        %v625 = vpop.xlane.xlu0 %624
        %v626 = vmax.f32 %v611, 1e-24
        %v627 = vmax.f32 %v613, 1e-24
        %v628 = vmax.f32 %v615, 1e-24
        %v629 = vmax.f32 %v617, 1e-24
        %v630 = vmax.f32 %v619, 1e-24
        %v631 = vmax.f32 %v621, 1e-24
        %v632 = vmax.f32 %v623, 1e-24
        %v633 = vmax.f32 %v625, 1e-24
        %v634 = vrsqrt.pop %v626
        %v635 = vrsqrt.pop %v627
        %v636 = vrsqrt.pop %v628
        %v637 = vrsqrt.pop %v629
        %v638 = vrsqrt.pop %v630
        %v639 = vrsqrt.pop %v631
        %v640 = vrsqrt.pop %v632
        %v641 = vrsqrt.pop %v633
        %v642 = vmul.f32 %v564, %v634
        %v643 = vmul.f32 %v569, %v635
        %v644 = vmul.f32 %v574, %v636
        %v645 = vmul.f32 %v579, %v637
        %v646 = vmul.f32 %v584, %v638
        %v647 = vmul.f32 %v589, %v639
        %v648 = vmul.f32 %v594, %v640
        %v649 = vmul.f32 %v599, %v641
        %v650 = vmax.f32 %v642, 0.0
        %v651 = vmax.f32 %v643, 0.0
        %v652 = vmax.f32 %v644, 0.0
        %v653 = vmax.f32 %v645, 0.0
        %v654 = vmax.f32 %v646, 0.0
        %v655 = vmax.f32 %v647, 0.0
        %v656 = vmax.f32 %v648, 0.0
        %v657 = vmax.f32 %v649, 0.0
        %658 = vst [vmem:[%s218] sm:$0xff] %v650
        %659 = vst [vmem:[%s218 + $0x8] sm:$0xff] %v651
        %660 = vst [vmem:[%s218 + $0x10] sm:$0xff] %v652
        %661 = vst [vmem:[%s218 + $0x18] sm:$0xff] %v653
        %662 = vst [vmem:[%s218 + $0x20] sm:$0xff] %v654
        %663 = vst [vmem:[%s218 + $0x28] sm:$0xff] %v655
        %664 = vst [vmem:[%s218 + $0x30] sm:$0xff] %v656
        %665 = vst [vmem:[%s218 + $0x38] sm:$0xff] %v657
        %s666 = sand.u32 %s137, 1
        %s667 = scalar_lea.sflag [#allocation3], %s666
        %s668 = sand.u32 %s137, 1
        %s669 = smul.addr %s668, 64
        %s670 = scalar_lea.vmem [#allocation2], %s669
        // Predicated region
        $region41: #{tpu_custom_call.1} parent=39 // pred_check
          %p671 = pneg %p147
        $region42: #{tpu_custom_call.1} parent=39 // pred_check_branch
          %673 = sbr.rel (%p671) target = $region44
        $region43: #{tpu_custom_call.1} parent=39 // pred_region
          %s674 = smul.u32 8, %s19
          %s676 = ssub.s32 1024, 1024
          %677 = vsyncadd %s667, %s676
          %s678 = smul.addr %s674, 128
          %s679 = scalar_lea.hbm %s5, %s678
          %s680 = sshll.u32 %s670, 4
          %s681 = int_to_ptr.vmem [resolvable:$true] %s680
          %686 = dma.vmem_to_hbm [thread:$0]  %s681, 1024, %s679, %s667, 128, 128, 8
        $region44: #{tpu_custom_call.1} parent=39 // pred_fallthru
          _
      $region40: #{tpu_custom_call.1} parent=5 // pred_fallthru
        _
      %p687 = scmp.le.s32.totalorder 2, %s14
      // Predicated region
      $region45: #{tpu_custom_call.1} parent=5 // pred_check
        %p688 = pneg %p687
      $region46: #{tpu_custom_call.1} parent=5 // pred_check_branch
        %690 = sbr.rel (%p688) target = $region48
      $region47: #{tpu_custom_call.1} parent=5 // pred_region
        %s691 = ssub.s32 %s14, 2
        // Predicated region
        $region49: #{tpu_custom_call.1} parent=47 // pred_check
          %p692 = pneg %p153
        $region50: #{tpu_custom_call.1} parent=47 // pred_check_branch
          %694 = sbr.rel (%p692) target = $region52
        $region51: #{tpu_custom_call.1} parent=47 // pred_region
          %s695 = sand.u32 %s138, 1
          %s696 = scalar_lea.sflag [#allocation3], %s695
          %s697 = sand.u32 %s138, 1
          %s698 = smul.addr %s697, 64
          %s699 = scalar_lea.vmem [#allocation2], %s698
          %700 = dma.done %s696, 1024
        $region52: #{tpu_custom_call.1} parent=47 // pred_fallthru
          _
      $region48: #{tpu_custom_call.1} parent=5 // pred_fallthru
        _
    $region6: #{tpu_custom_call.1} parent=1 // loop_footer
      %s18 = sadd.s32 1, %s14
    $region7: #{tpu_custom_call.1} parent=1 // loop_footer_branch
      %13 = sbr.rel target = $region3
    $region8: #{tpu_custom_call.1} parent=1 // loop_exit
      _
    %701 = vsyncpa [#allocation3], 1
    %s702 = scalar_lea.sflag [#allocation3], 1
    %703 = vsyncpa %s702, 1

</llo_original>
